<compile_context>
chip_gen: v5e
topology: v5e:2x2
jax: 0.10.0
libtpu: 0.0.40
codegen_flags: <defaults>
</compile_context>

<pallas_src>
import functools
import math

import jax
import jax.numpy as jnp
from jax.experimental import pallas as pl
from jax.experimental.pallas import tpu as pltpu


# ----------------------------- Pallas kernel -------------------------------

def _stable_softplus(v):
    # log1p(exp(v)) without overflow for large v (safe if rho is ever learned upward).
    return jnp.maximum(v, 0.0) + jnp.log1p(jnp.exp(-jnp.abs(v)))


def _hbnn_fused_kernel(priors_ref, x_ref, *refs, n_layers: int):
    """Whole-network forward.

    refs layout: [wmu_t, wrho_t, nw_t, bmu, brho, nb] * n_layers + [y_ref, kl_ref]
      wmu_t / wrho_t / nw_t : (in_features, out_features)  -- pre-transposed
      bmu / brho / nb       : (1, out_features)
    priors_ref (SMEM, 1-D): [prior_mu_0, prior_logvar_0, prior_mu_1, ...]
    """
    y_ref, kl_ref = refs[-2], refs[-1]
    layer_refs = refs[:-2]

    x = x_ref[...]                       # (B_pad, in_features), stays on-chip throughout
    kl = jnp.float32(0.0)

    for i in range(n_layers):
        (wmu_r, wrho_r, nw_r, bmu_r, brho_r, nb_r) = layer_refs[6 * i: 6 * i + 6]

        pmu = priors_ref[2 * i]          # prior_mu (scalar, SMEM)
        plv = priors_ref[2 * i + 1]      # prior_logvar (scalar, SMEM)
        inv_two_var = 0.5 * jnp.exp(-plv)   # hoisted: 1 / (2 * exp(plv))

        # --- reparameterized sample (f32 elementwise) ---
        wmu = wmu_r[...]                 # (in, out)
        w_sigma = _stable_softplus(wrho_r[...])
        w = wmu + w_sigma * nw_r[...]

        bmu = bmu_r[...]                 # (1, out)
        b_sigma = _stable_softplus(brho_r[...])
        b = bmu + b_sigma * nb_r[...]

        # --- linear (+ ReLU on hidden layers); activation never hits HBM ---
        y = jnp.dot(x, w, preferred_element_type=jnp.float32) + b
        if i < n_layers - 1:
            y = jnp.maximum(y, 0.0)
        x = y

        # --- KL(q || N(pmu, exp(plv))), simplified:
        #     log(sqrt(prior_var)/sigma) == 0.5*plv - log(sigma)
        #     (...)/(2*prior_var)        == (...) * inv_two_var
        def kl_term(mu, sigma):
            return jnp.sum(0.5 * plv - jnp.log(sigma)
                           + (sigma * sigma + (mu - pmu) ** 2) * inv_two_var
                           - 0.5)

        kl = (kl + kl_term(wmu, w_sigma) + kl_term(bmu, b_sigma)
              + 0.5 * pmu * pmu + 0.5 * plv * plv)

    y_ref[...] = x.astype(y_ref.dtype)
    kl_ref[0, 0] = kl


# ------------------------------ JAX wrapper ---------------------------------

def hbnn_forward(x, all_params, noise_key):
    """HierarchicalBayesianNeuralNetwork.forward: returns (output, kl_sum)."""
    n_layers = len(all_params)
    B, in_dim = x.shape
    B_pad = ((B + 7) // 8) * 8                       # pad batch to 8 sublanes
    out_dim = all_params[-1][0].shape[0]

    x_pad = jnp.zeros((B_pad, in_dim), jnp.float32).at[:B, :].set(
        x.astype(jnp.float32))

    vmem = pl.BlockSpec(memory_space=pltpu.MemorySpace.VMEM)
    smem = pl.BlockSpec(memory_space=pltpu.MemorySpace.SMEM)

    layer_args = []
    priors = []
    noise_keys = jax.random.split(noise_key, 2 * n_layers)
    for i, (wmu, wrho, bmu, brho, pmu, plv) in enumerate(all_params):
        out_f, in_f = wmu.shape
        # Noise generated directly in the transposed layout (same distribution).
        nw_t = jax.random.normal(noise_keys[2 * i], (in_f, out_f), jnp.float32)
        nb = jax.random.normal(noise_keys[2 * i + 1], (1, out_f), jnp.float32)
        layer_args += [wmu.T, wrho.T, nw_t,
                       bmu.reshape(1, -1), brho.reshape(1, -1), nb]
        priors += [pmu.reshape(-1), plv.reshape(-1)]
    priors_arr = jnp.concatenate(priors).astype(jnp.float32)

    kernel = functools.partial(_hbnn_fused_kernel, n_layers=n_layers)

    y_pad, kl = pl.pallas_call(
        kernel,
        out_shape=(
            jax.ShapeDtypeStruct((B_pad, out_dim), jnp.float32),
            jax.ShapeDtypeStruct((1, 1), jnp.float32),
        ),
        in_specs=[smem, vmem] + [vmem] * (6 * n_layers),
        out_specs=(vmem, smem),
    )(priors_arr, x_pad, *layer_args)

    return y_pad[:B], kl[0, 0]


hbnn_forward_jit = jax.jit(hbnn_forward)


# ------------------------ parameter initialization -------------------------

def init_layer_params(key, in_features, out_features):
    """Deterministic replica of HierarchicalBayesianLinear.reset_parameters()."""
    k_w, k_b = jax.random.split(key)
    # kaiming_uniform_(a=sqrt(5))  ->  bound = 1/sqrt(fan_in)
    bound = 1.0 / math.sqrt(in_features)
    weight_mu = jax.random.uniform(k_w, (out_features, in_features),
                                   jnp.float32, -bound, bound)
    weight_rho = jnp.full((out_features, in_features), -5.0, jnp.float32)
    bias_mu = jax.random.uniform(k_b, (out_features,), jnp.float32, -0.1, 0.1)
    bias_rho = jnp.full((out_features,), -5.0, jnp.float32)
    prior_mu = jnp.zeros((1,), jnp.float32)
    prior_logvar = jnp.zeros((1,), jnp.float32)
    return (weight_mu, weight_rho, bias_mu, bias_rho, prior_mu, prior_logvar)


def init_network(key, input_dim, hidden_dims, output_dim):
    dims = [input_dim] + list(hidden_dims) + [output_dim]
    params = []
    for i in range(len(dims) - 1):
        key, sub = jax.random.split(key)
        params.append(init_layer_params(sub, dims[i], dims[i + 1]))
    return params


# --------------------------------- main -------------------------------------

if __name__ == "__main__":
    key = jax.random.PRNGKey(0)
    k_params, k_data, k_noise = jax.random.split(key, 3)

    input_dim, hidden_dims, output_dim = 16, [32, 32], 8
    batch = 4

    all_params = init_network(k_params, input_dim, hidden_dims, output_dim)
    x = jax.random.normal(k_data, (batch, input_dim), jnp.float32)

    out, kl = hbnn_forward_jit(x, all_params, k_noise)
    jax.block_until_ready((out, kl))

    assert out.shape == (batch, output_dim)
    assert kl.shape == ()
    assert bool(jnp.isfinite(kl)) and bool(jnp.all(jnp.isfinite(out)))
    print("KERNEL_OK")
</pallas_src>

<mosaic_0001>
module attributes {stable_mosaic.version = 11 : i64} {
  func.func @_hbnn_fused_kernel(%arg0: memref<6xf32, #tpu.memory_space<smem>>, %arg1: memref<8x16xf32, #tpu.memory_space<vmem>>, %arg2: memref<16x32xf32, #tpu.memory_space<vmem>>, %arg3: memref<16x32xf32, #tpu.memory_space<vmem>>, %arg4: memref<16x32xf32, #tpu.memory_space<vmem>>, %arg5: memref<1x32xf32, #tpu.memory_space<vmem>>, %arg6: memref<1x32xf32, #tpu.memory_space<vmem>>, %arg7: memref<1x32xf32, #tpu.memory_space<vmem>>, %arg8: memref<32x32xf32, #tpu.memory_space<vmem>>, %arg9: memref<32x32xf32, #tpu.memory_space<vmem>>, %arg10: memref<32x32xf32, #tpu.memory_space<vmem>>, %arg11: memref<1x32xf32, #tpu.memory_space<vmem>>, %arg12: memref<1x32xf32, #tpu.memory_space<vmem>>, %arg13: memref<1x32xf32, #tpu.memory_space<vmem>>, %arg14: memref<32x8xf32, #tpu.memory_space<vmem>>, %arg15: memref<32x8xf32, #tpu.memory_space<vmem>>, %arg16: memref<32x8xf32, #tpu.memory_space<vmem>>, %arg17: memref<1x8xf32, #tpu.memory_space<vmem>>, %arg18: memref<1x8xf32, #tpu.memory_space<vmem>>, %arg19: memref<1x8xf32, #tpu.memory_space<vmem>>, %arg20: memref<8x8xf32, #tpu.memory_space<vmem>>, %arg21: memref<1x1xf32, #tpu.memory_space<smem>>) attributes {dimension_semantics = [], scalar_prefetch = 0 : i64, scratch_operands = 0 : i64, tpu.core_type = #tpu.core_type<tc>} {
    %c0 = arith.constant 0 : index
    %c0_0 = arith.constant 0 : index
    %0 = vector.load %arg1[%c0, %c0_0] : memref<8x16xf32, #tpu.memory_space<vmem>>, vector<8x16xf32>
    %c0_1 = arith.constant 0 : index
    %1 = memref.load %arg0[%c0_1] : memref<6xf32, #tpu.memory_space<smem>>
    %c1 = arith.constant 1 : index
    %2 = memref.load %arg0[%c1] : memref<6xf32, #tpu.memory_space<smem>>
    %cst = arith.constant 0.000000e+00 : f32
    %3 = arith.subf %cst, %2 : f32
    %4 = math.exp %3 : f32
    %cst_2 = arith.constant 5.000000e-01 : f32
    %5 = arith.mulf %cst_2, %4 : f32
    %c0_3 = arith.constant 0 : index
    %c0_4 = arith.constant 0 : index
    %6 = vector.load %arg2[%c0_3, %c0_4] : memref<16x32xf32, #tpu.memory_space<vmem>>, vector<16x32xf32>
    %c0_5 = arith.constant 0 : index
    %c0_6 = arith.constant 0 : index
    %7 = vector.load %arg3[%c0_5, %c0_6] : memref<16x32xf32, #tpu.memory_space<vmem>>, vector<16x32xf32>
    %cst_7 = arith.constant 0.000000e+00 : f32
    %8 = vector.broadcast %cst_7 : f32 to vector<16x32xf32>
    %9 = arith.maximumf %7, %8 : vector<16x32xf32>
    %10 = math.absf %7 : vector<16x32xf32>
    %cst_8 = arith.constant 0.000000e+00 : f32
    %11 = vector.broadcast %cst_8 : f32 to vector<16x32xf32>
    %12 = arith.subf %11, %10 : vector<16x32xf32>
    %13 = math.exp %12 : vector<16x32xf32>
    %14 = math.log1p %13 : vector<16x32xf32>
    %15 = arith.addf %9, %14 : vector<16x32xf32>
    %c0_9 = arith.constant 0 : index
    %c0_10 = arith.constant 0 : index
    %16 = vector.load %arg4[%c0_9, %c0_10] : memref<16x32xf32, #tpu.memory_space<vmem>>, vector<16x32xf32>
    %17 = arith.mulf %15, %16 : vector<16x32xf32>
    %18 = arith.addf %6, %17 : vector<16x32xf32>
    %c0_11 = arith.constant 0 : index
    %c0_12 = arith.constant 0 : index
    %19 = vector.load %arg5[%c0_11, %c0_12] : memref<1x32xf32, #tpu.memory_space<vmem>>, vector<1x32xf32>
    %c0_13 = arith.constant 0 : index
    %c0_14 = arith.constant 0 : index
    %20 = vector.load %arg6[%c0_13, %c0_14] : memref<1x32xf32, #tpu.memory_space<vmem>>, vector<1x32xf32>
    %cst_15 = arith.constant 0.000000e+00 : f32
    %21 = vector.broadcast %cst_15 : f32 to vector<1x32xf32>
    %22 = arith.maximumf %20, %21 : vector<1x32xf32>
    %23 = math.absf %20 : vector<1x32xf32>
    %cst_16 = arith.constant 0.000000e+00 : f32
    %24 = vector.broadcast %cst_16 : f32 to vector<1x32xf32>
    %25 = arith.subf %24, %23 : vector<1x32xf32>
    %26 = math.exp %25 : vector<1x32xf32>
    %27 = math.log1p %26 : vector<1x32xf32>
    %28 = arith.addf %22, %27 : vector<1x32xf32>
    %c0_17 = arith.constant 0 : index
    %c0_18 = arith.constant 0 : index
    %29 = vector.load %arg7[%c0_17, %c0_18] : memref<1x32xf32, #tpu.memory_space<vmem>>, vector<1x32xf32>
    %30 = arith.mulf %28, %29 : vector<1x32xf32>
    %31 = arith.addf %19, %30 : vector<1x32xf32>
    %cst_19 = arith.constant dense<0.000000e+00> : vector<8x32xf32>
    %32 = tpu.matmul %0, %18, %cst_19 {dimension_numbers = #tpu.dot_dimension_numbers<[1], [0], [0], [1], [0, 0, 1, 1], [], []>} : vector<8x16xf32>, vector<16x32xf32>, vector<8x32xf32> -> vector<8x32xf32>
    %33 = vector.broadcast %31 : vector<1x32xf32> to vector<8x32xf32>
    %34 = arith.addf %32, %33 : vector<8x32xf32>
    %cst_20 = arith.constant 0.000000e+00 : f32
    %35 = vector.broadcast %cst_20 : f32 to vector<8x32xf32>
    %36 = arith.maximumf %34, %35 : vector<8x32xf32>
    %cst_21 = arith.constant 5.000000e-01 : f32
    %37 = arith.mulf %cst_21, %2 : f32
    %38 = math.log %15 : vector<16x32xf32>
    %39 = vector.broadcast %37 : f32 to vector<16x32xf32>
    %40 = arith.subf %39, %38 : vector<16x32xf32>
    %41 = arith.mulf %15, %15 : vector<16x32xf32>
    %42 = vector.broadcast %1 : f32 to vector<16x32xf32>
    %43 = arith.subf %6, %42 : vector<16x32xf32>
    %44 = arith.mulf %43, %43 : vector<16x32xf32>
    %45 = arith.addf %41, %44 : vector<16x32xf32>
    %46 = vector.broadcast %5 : f32 to vector<16x32xf32>
    %47 = arith.mulf %45, %46 : vector<16x32xf32>
    %48 = arith.addf %40, %47 : vector<16x32xf32>
    %cst_22 = arith.constant 5.000000e-01 : f32
    %49 = vector.broadcast %cst_22 : f32 to vector<16x32xf32>
    %50 = arith.subf %48, %49 : vector<16x32xf32>
    %51 = vector.shape_cast %50 : vector<16x32xf32> to vector<1x16x32xf32>
    %cst_23 = arith.constant dense<0.000000e+00> : vector<1xf32>
    %52 = vector.multi_reduction <add>, %51, %cst_23 [1, 2] : vector<1x16x32xf32> to vector<1xf32>
    %53 = vector.shape_cast %52 : vector<1xf32> to vector<1x1x1xf32>
    %54 = vector.extract %53[0, 0, 0] : f32 from vector<1x1x1xf32>
    %cst_24 = arith.constant 0.000000e+00 : f32
    %55 = arith.addf %cst_24, %54 : f32
    %cst_25 = arith.constant 5.000000e-01 : f32
    %56 = arith.mulf %cst_25, %2 : f32
    %57 = math.log %28 : vector<1x32xf32>
    %58 = vector.broadcast %56 : f32 to vector<1x32xf32>
    %59 = arith.subf %58, %57 : vector<1x32xf32>
    %60 = arith.mulf %28, %28 : vector<1x32xf32>
    %61 = vector.broadcast %1 : f32 to vector<1x32xf32>
    %62 = arith.subf %19, %61 : vector<1x32xf32>
    %63 = arith.mulf %62, %62 : vector<1x32xf32>
    %64 = arith.addf %60, %63 : vector<1x32xf32>
    %65 = vector.broadcast %5 : f32 to vector<1x32xf32>
    %66 = arith.mulf %64, %65 : vector<1x32xf32>
    %67 = arith.addf %59, %66 : vector<1x32xf32>
    %cst_26 = arith.constant 5.000000e-01 : f32
    %68 = vector.broadcast %cst_26 : f32 to vector<1x32xf32>
    %69 = arith.subf %67, %68 : vector<1x32xf32>
    %70 = vector.shape_cast %69 : vector<1x32xf32> to vector<1x1x32xf32>
    %cst_27 = arith.constant dense<0.000000e+00> : vector<1xf32>
    %71 = vector.multi_reduction <add>, %70, %cst_27 [1, 2] : vector<1x1x32xf32> to vector<1xf32>
    %72 = vector.shape_cast %71 : vector<1xf32> to vector<1x1x1xf32>
    %73 = vector.extract %72[0, 0, 0] : f32 from vector<1x1x1xf32>
    %74 = arith.addf %55, %73 : f32
    %cst_28 = arith.constant 5.000000e-01 : f32
    %75 = arith.mulf %cst_28, %1 : f32
    %76 = arith.mulf %75, %1 : f32
    %77 = arith.addf %74, %76 : f32
    %cst_29 = arith.constant 5.000000e-01 : f32
    %78 = arith.mulf %cst_29, %2 : f32
    %79 = arith.mulf %78, %2 : f32
    %80 = arith.addf %77, %79 : f32
    %c2 = arith.constant 2 : index
    %81 = memref.load %arg0[%c2] : memref<6xf32, #tpu.memory_space<smem>>
    %c3 = arith.constant 3 : index
    %82 = memref.load %arg0[%c3] : memref<6xf32, #tpu.memory_space<smem>>
    %cst_30 = arith.constant 0.000000e+00 : f32
    %83 = arith.subf %cst_30, %82 : f32
    %84 = math.exp %83 : f32
    %cst_31 = arith.constant 5.000000e-01 : f32
    %85 = arith.mulf %cst_31, %84 : f32
    %c0_32 = arith.constant 0 : index
    %c0_33 = arith.constant 0 : index
    %86 = vector.load %arg8[%c0_32, %c0_33] : memref<32x32xf32, #tpu.memory_space<vmem>>, vector<32x32xf32>
    %c0_34 = arith.constant 0 : index
    %c0_35 = arith.constant 0 : index
    %87 = vector.load %arg9[%c0_34, %c0_35] : memref<32x32xf32, #tpu.memory_space<vmem>>, vector<32x32xf32>
    %cst_36 = arith.constant 0.000000e+00 : f32
    %88 = vector.broadcast %cst_36 : f32 to vector<32x32xf32>
    %89 = arith.maximumf %87, %88 : vector<32x32xf32>
    %90 = math.absf %87 : vector<32x32xf32>
    %cst_37 = arith.constant 0.000000e+00 : f32
    %91 = vector.broadcast %cst_37 : f32 to vector<32x32xf32>
    %92 = arith.subf %91, %90 : vector<32x32xf32>
    %93 = math.exp %92 : vector<32x32xf32>
    %94 = math.log1p %93 : vector<32x32xf32>
    %95 = arith.addf %89, %94 : vector<32x32xf32>
    %c0_38 = arith.constant 0 : index
    %c0_39 = arith.constant 0 : index
    %96 = vector.load %arg10[%c0_38, %c0_39] : memref<32x32xf32, #tpu.memory_space<vmem>>, vector<32x32xf32>
    %97 = arith.mulf %95, %96 : vector<32x32xf32>
    %98 = arith.addf %86, %97 : vector<32x32xf32>
    %c0_40 = arith.constant 0 : index
    %c0_41 = arith.constant 0 : index
    %99 = vector.load %arg11[%c0_40, %c0_41] : memref<1x32xf32, #tpu.memory_space<vmem>>, vector<1x32xf32>
    %c0_42 = arith.constant 0 : index
    %c0_43 = arith.constant 0 : index
    %100 = vector.load %arg12[%c0_42, %c0_43] : memref<1x32xf32, #tpu.memory_space<vmem>>, vector<1x32xf32>
    %cst_44 = arith.constant 0.000000e+00 : f32
    %101 = vector.broadcast %cst_44 : f32 to vector<1x32xf32>
    %102 = arith.maximumf %100, %101 : vector<1x32xf32>
    %103 = math.absf %100 : vector<1x32xf32>
    %cst_45 = arith.constant 0.000000e+00 : f32
    %104 = vector.broadcast %cst_45 : f32 to vector<1x32xf32>
    %105 = arith.subf %104, %103 : vector<1x32xf32>
    %106 = math.exp %105 : vector<1x32xf32>
    %107 = math.log1p %106 : vector<1x32xf32>
    %108 = arith.addf %102, %107 : vector<1x32xf32>
    %c0_46 = arith.constant 0 : index
    %c0_47 = arith.constant 0 : index
    %109 = vector.load %arg13[%c0_46, %c0_47] : memref<1x32xf32, #tpu.memory_space<vmem>>, vector<1x32xf32>
    %110 = arith.mulf %108, %109 : vector<1x32xf32>
    %111 = arith.addf %99, %110 : vector<1x32xf32>
    %cst_48 = arith.constant dense<0.000000e+00> : vector<8x32xf32>
    %112 = tpu.matmul %36, %98, %cst_48 {dimension_numbers = #tpu.dot_dimension_numbers<[1], [0], [0], [1], [0, 0, 1, 1], [], []>} : vector<8x32xf32>, vector<32x32xf32>, vector<8x32xf32> -> vector<8x32xf32>
    %113 = vector.broadcast %111 : vector<1x32xf32> to vector<8x32xf32>
    %114 = arith.addf %112, %113 : vector<8x32xf32>
    %cst_49 = arith.constant 0.000000e+00 : f32
    %115 = vector.broadcast %cst_49 : f32 to vector<8x32xf32>
    %116 = arith.maximumf %114, %115 : vector<8x32xf32>
    %cst_50 = arith.constant 5.000000e-01 : f32
    %117 = arith.mulf %cst_50, %82 : f32
    %118 = math.log %95 : vector<32x32xf32>
    %119 = vector.broadcast %117 : f32 to vector<32x32xf32>
    %120 = arith.subf %119, %118 : vector<32x32xf32>
    %121 = arith.mulf %95, %95 : vector<32x32xf32>
    %122 = vector.broadcast %81 : f32 to vector<32x32xf32>
    %123 = arith.subf %86, %122 : vector<32x32xf32>
    %124 = arith.mulf %123, %123 : vector<32x32xf32>
    %125 = arith.addf %121, %124 : vector<32x32xf32>
    %126 = vector.broadcast %85 : f32 to vector<32x32xf32>
    %127 = arith.mulf %125, %126 : vector<32x32xf32>
    %128 = arith.addf %120, %127 : vector<32x32xf32>
    %cst_51 = arith.constant 5.000000e-01 : f32
    %129 = vector.broadcast %cst_51 : f32 to vector<32x32xf32>
    %130 = arith.subf %128, %129 : vector<32x32xf32>
    %131 = vector.shape_cast %130 : vector<32x32xf32> to vector<1x32x32xf32>
    %cst_52 = arith.constant dense<0.000000e+00> : vector<1xf32>
    %132 = vector.multi_reduction <add>, %131, %cst_52 [1, 2] : vector<1x32x32xf32> to vector<1xf32>
    %133 = vector.shape_cast %132 : vector<1xf32> to vector<1x1x1xf32>
    %134 = vector.extract %133[0, 0, 0] : f32 from vector<1x1x1xf32>
    %135 = arith.addf %80, %134 : f32
    %cst_53 = arith.constant 5.000000e-01 : f32
    %136 = arith.mulf %cst_53, %82 : f32
    %137 = math.log %108 : vector<1x32xf32>
    %138 = vector.broadcast %136 : f32 to vector<1x32xf32>
    %139 = arith.subf %138, %137 : vector<1x32xf32>
    %140 = arith.mulf %108, %108 : vector<1x32xf32>
    %141 = vector.broadcast %81 : f32 to vector<1x32xf32>
    %142 = arith.subf %99, %141 : vector<1x32xf32>
    %143 = arith.mulf %142, %142 : vector<1x32xf32>
    %144 = arith.addf %140, %143 : vector<1x32xf32>
    %145 = vector.broadcast %85 : f32 to vector<1x32xf32>
    %146 = arith.mulf %144, %145 : vector<1x32xf32>
    %147 = arith.addf %139, %146 : vector<1x32xf32>
    %cst_54 = arith.constant 5.000000e-01 : f32
    %148 = vector.broadcast %cst_54 : f32 to vector<1x32xf32>
    %149 = arith.subf %147, %148 : vector<1x32xf32>
    %150 = vector.shape_cast %149 : vector<1x32xf32> to vector<1x1x32xf32>
    %cst_55 = arith.constant dense<0.000000e+00> : vector<1xf32>
    %151 = vector.multi_reduction <add>, %150, %cst_55 [1, 2] : vector<1x1x32xf32> to vector<1xf32>
    %152 = vector.shape_cast %151 : vector<1xf32> to vector<1x1x1xf32>
    %153 = vector.extract %152[0, 0, 0] : f32 from vector<1x1x1xf32>
    %154 = arith.addf %135, %153 : f32
    %cst_56 = arith.constant 5.000000e-01 : f32
    %155 = arith.mulf %cst_56, %81 : f32
    %156 = arith.mulf %155, %81 : f32
    %157 = arith.addf %154, %156 : f32
    %cst_57 = arith.constant 5.000000e-01 : f32
    %158 = arith.mulf %cst_57, %82 : f32
    %159 = arith.mulf %158, %82 : f32
    %160 = arith.addf %157, %159 : f32
    %c4 = arith.constant 4 : index
    %161 = memref.load %arg0[%c4] : memref<6xf32, #tpu.memory_space<smem>>
    %c5 = arith.constant 5 : index
    %162 = memref.load %arg0[%c5] : memref<6xf32, #tpu.memory_space<smem>>
    %cst_58 = arith.constant 0.000000e+00 : f32
    %163 = arith.subf %cst_58, %162 : f32
    %164 = math.exp %163 : f32
    %cst_59 = arith.constant 5.000000e-01 : f32
    %165 = arith.mulf %cst_59, %164 : f32
    %c0_60 = arith.constant 0 : index
    %c0_61 = arith.constant 0 : index
    %166 = vector.load %arg14[%c0_60, %c0_61] : memref<32x8xf32, #tpu.memory_space<vmem>>, vector<32x8xf32>
    %c0_62 = arith.constant 0 : index
    %c0_63 = arith.constant 0 : index
    %167 = vector.load %arg15[%c0_62, %c0_63] : memref<32x8xf32, #tpu.memory_space<vmem>>, vector<32x8xf32>
    %cst_64 = arith.constant 0.000000e+00 : f32
    %168 = vector.broadcast %cst_64 : f32 to vector<32x8xf32>
    %169 = arith.maximumf %167, %168 : vector<32x8xf32>
    %170 = math.absf %167 : vector<32x8xf32>
    %cst_65 = arith.constant 0.000000e+00 : f32
    %171 = vector.broadcast %cst_65 : f32 to vector<32x8xf32>
    %172 = arith.subf %171, %170 : vector<32x8xf32>
    %173 = math.exp %172 : vector<32x8xf32>
    %174 = math.log1p %173 : vector<32x8xf32>
    %175 = arith.addf %169, %174 : vector<32x8xf32>
    %c0_66 = arith.constant 0 : index
    %c0_67 = arith.constant 0 : index
    %176 = vector.load %arg16[%c0_66, %c0_67] : memref<32x8xf32, #tpu.memory_space<vmem>>, vector<32x8xf32>
    %177 = arith.mulf %175, %176 : vector<32x8xf32>
    %178 = arith.addf %166, %177 : vector<32x8xf32>
    %c0_68 = arith.constant 0 : index
    %c0_69 = arith.constant 0 : index
    %179 = vector.load %arg17[%c0_68, %c0_69] : memref<1x8xf32, #tpu.memory_space<vmem>>, vector<1x8xf32>
    %c0_70 = arith.constant 0 : index
    %c0_71 = arith.constant 0 : index
    %180 = vector.load %arg18[%c0_70, %c0_71] : memref<1x8xf32, #tpu.memory_space<vmem>>, vector<1x8xf32>
    %cst_72 = arith.constant 0.000000e+00 : f32
    %181 = vector.broadcast %cst_72 : f32 to vector<1x8xf32>
    %182 = arith.maximumf %180, %181 : vector<1x8xf32>
    %183 = math.absf %180 : vector<1x8xf32>
    %cst_73 = arith.constant 0.000000e+00 : f32
    %184 = vector.broadcast %cst_73 : f32 to vector<1x8xf32>
    %185 = arith.subf %184, %183 : vector<1x8xf32>
    %186 = math.exp %185 : vector<1x8xf32>
    %187 = math.log1p %186 : vector<1x8xf32>
    %188 = arith.addf %182, %187 : vector<1x8xf32>
    %c0_74 = arith.constant 0 : index
    %c0_75 = arith.constant 0 : index
    %189 = vector.load %arg19[%c0_74, %c0_75] : memref<1x8xf32, #tpu.memory_space<vmem>>, vector<1x8xf32>
    %190 = arith.mulf %188, %189 : vector<1x8xf32>
    %191 = arith.addf %179, %190 : vector<1x8xf32>
    %cst_76 = arith.constant dense<0.000000e+00> : vector<8x8xf32>
    %192 = tpu.matmul %116, %178, %cst_76 {dimension_numbers = #tpu.dot_dimension_numbers<[1], [0], [0], [1], [0, 0, 1, 1], [], []>} : vector<8x32xf32>, vector<32x8xf32>, vector<8x8xf32> -> vector<8x8xf32>
    %193 = vector.broadcast %191 : vector<1x8xf32> to vector<8x8xf32>
    %194 = arith.addf %192, %193 : vector<8x8xf32>
    %cst_77 = arith.constant 5.000000e-01 : f32
    %195 = arith.mulf %cst_77, %162 : f32
    %196 = math.log %175 : vector<32x8xf32>
    %197 = vector.broadcast %195 : f32 to vector<32x8xf32>
    %198 = arith.subf %197, %196 : vector<32x8xf32>
    %199 = arith.mulf %175, %175 : vector<32x8xf32>
    %200 = vector.broadcast %161 : f32 to vector<32x8xf32>
    %201 = arith.subf %166, %200 : vector<32x8xf32>
    %202 = arith.mulf %201, %201 : vector<32x8xf32>
    %203 = arith.addf %199, %202 : vector<32x8xf32>
    %204 = vector.broadcast %165 : f32 to vector<32x8xf32>
    %205 = arith.mulf %203, %204 : vector<32x8xf32>
    %206 = arith.addf %198, %205 : vector<32x8xf32>
    %cst_78 = arith.constant 5.000000e-01 : f32
    %207 = vector.broadcast %cst_78 : f32 to vector<32x8xf32>
    %208 = arith.subf %206, %207 : vector<32x8xf32>
    %209 = vector.shape_cast %208 : vector<32x8xf32> to vector<1x32x8xf32>
    %cst_79 = arith.constant dense<0.000000e+00> : vector<1xf32>
    %210 = vector.multi_reduction <add>, %209, %cst_79 [1, 2] : vector<1x32x8xf32> to vector<1xf32>
    %211 = vector.shape_cast %210 : vector<1xf32> to vector<1x1x1xf32>
    %212 = vector.extract %211[0, 0, 0] : f32 from vector<1x1x1xf32>
    %213 = arith.addf %160, %212 : f32
    %cst_80 = arith.constant 5.000000e-01 : f32
    %214 = arith.mulf %cst_80, %162 : f32
    %215 = math.log %188 : vector<1x8xf32>
    %216 = vector.broadcast %214 : f32 to vector<1x8xf32>
    %217 = arith.subf %216, %215 : vector<1x8xf32>
    %218 = arith.mulf %188, %188 : vector<1x8xf32>
    %219 = vector.broadcast %161 : f32 to vector<1x8xf32>
    %220 = arith.subf %179, %219 : vector<1x8xf32>
    %221 = arith.mulf %220, %220 : vector<1x8xf32>
    %222 = arith.addf %218, %221 : vector<1x8xf32>
    %223 = vector.broadcast %165 : f32 to vector<1x8xf32>
    %224 = arith.mulf %222, %223 : vector<1x8xf32>
    %225 = arith.addf %217, %224 : vector<1x8xf32>
    %cst_81 = arith.constant 5.000000e-01 : f32
    %226 = vector.broadcast %cst_81 : f32 to vector<1x8xf32>
    %227 = arith.subf %225, %226 : vector<1x8xf32>
    %228 = vector.shape_cast %227 : vector<1x8xf32> to vector<1x1x8xf32>
    %cst_82 = arith.constant dense<0.000000e+00> : vector<1xf32>
    %229 = vector.multi_reduction <add>, %228, %cst_82 [1, 2] : vector<1x1x8xf32> to vector<1xf32>
    %230 = vector.shape_cast %229 : vector<1xf32> to vector<1x1x1xf32>
    %231 = vector.extract %230[0, 0, 0] : f32 from vector<1x1x1xf32>
    %232 = arith.addf %213, %231 : f32
    %cst_83 = arith.constant 5.000000e-01 : f32
    %233 = arith.mulf %cst_83, %161 : f32
    %234 = arith.mulf %233, %161 : f32
    %235 = arith.addf %232, %234 : f32
    %cst_84 = arith.constant 5.000000e-01 : f32
    %236 = arith.mulf %cst_84, %162 : f32
    %237 = arith.mulf %236, %162 : f32
    %238 = arith.addf %235, %237 : f32
    %c0_85 = arith.constant 0 : index
    %c0_86 = arith.constant 0 : index
    %239 = vector.load %arg20[%c0_85, %c0_86] : memref<8x8xf32, #tpu.memory_space<vmem>>, vector<8x8xf32>
    tpu.vector_store %arg20[%c0_85, %c0_86], %194 {strides = array<i32>} : memref<8x8xf32, #tpu.memory_space<vmem>>, vector<8x8xf32>,
    %c0_87 = arith.constant 0 : index
    %c0_88 = arith.constant 0 : index
    %240 = memref.load %arg21[%c0_87, %c0_88] : memref<1x1xf32, #tpu.memory_space<smem>>
    memref.store %238, %arg21[%c0_87, %c0_88] : memref<1x1xf32, #tpu.memory_space<smem>>
    return
  }
}

</mosaic_0001>

<llo_original>
// kernel: hbnn_forward.3
$region0: #{hbnn_forward.3}
  #allocation0 [shape = 'u32[]', space=smem, size = 0x4, offset = 0x4, fixed_abs, tag = 'smem constant byte address 0x4 - core index']
  #allocation1 [shape = 'u32[72,128]{1,0:T(1,128)}', space=vmem, size = 0x9000, scoped, tag = 'internal scratch']
  %s0 = inlined_call_operand.vmem [shape: f32[6], index: 0, kind: input, shape index: {}]
  %s1 = inlined_call_operand.vmem [shape: f32[8,16], index: 1, kind: input, shape index: {}]
  %s2 = inlined_call_operand.vmem [shape: f32[16,32], index: 2, kind: input, shape index: {}]
  %s3 = inlined_call_operand.vmem [shape: f32[16,32], index: 3, kind: input, shape index: {}]
  %s4 = inlined_call_operand.vmem [shape: f32[16,32], index: 4, kind: input, shape index: {}]
  %s5 = inlined_call_operand.vmem [shape: f32[1,32], index: 5, kind: input, shape index: {}]
  %s6 = inlined_call_operand.vmem [shape: f32[1,32], index: 6, kind: input, shape index: {}]
  %s7 = inlined_call_operand.vmem [shape: f32[1,32], index: 7, kind: input, shape index: {}]
  %s8 = inlined_call_operand.vmem [shape: f32[32,32], index: 8, kind: input, shape index: {}]
  %s9 = inlined_call_operand.vmem [shape: f32[32,32], index: 9, kind: input, shape index: {}]
  %s10 = inlined_call_operand.vmem [shape: f32[32,32], index: 10, kind: input, shape index: {}]
  %s11 = inlined_call_operand.vmem [shape: f32[1,32], index: 11, kind: input, shape index: {}]
  %s12 = inlined_call_operand.vmem [shape: f32[1,32], index: 12, kind: input, shape index: {}]
  %s13 = inlined_call_operand.vmem [shape: f32[1,32], index: 13, kind: input, shape index: {}]
  %s14 = inlined_call_operand.vmem [shape: f32[32,8], index: 14, kind: input, shape index: {}]
  %s15 = inlined_call_operand.vmem [shape: f32[32,8], index: 15, kind: input, shape index: {}]
  %s16 = inlined_call_operand.vmem [shape: f32[32,8], index: 16, kind: input, shape index: {}]
  %s17 = inlined_call_operand.vmem [shape: f32[1,8], index: 17, kind: input, shape index: {}]
  %s18 = inlined_call_operand.vmem [shape: f32[1,8], index: 18, kind: input, shape index: {}]
  %s19 = inlined_call_operand.vmem [shape: f32[1,8], index: 19, kind: input, shape index: {}]
  %s20 = inlined_call_operand.vmem [shape: f32[8,8], index: 20, kind: output, shape index: {0}]
  %s21 = inlined_call_operand.hbm [shape: f32[1,1], index: 21, kind: output, shape index: {1}]
  %22 = xla_tuple %s20, %s21
  %s23 = sld [smem:[#allocation0]]
  $region102: #{hbnn_forward.3} parent=0
    _
  %s25 = ssub.s32 1, %s23
  %s26 = scalar_select 0, %s25, %s23
  $region1: #{hbnn_forward.3} parent=0
    #allocation2 [shape = 'u8[512]{0}', space=smem, size = 0x200, scoped, tag = 'input window, operand 0, single buffered']
    #allocation3 [shape = 's32[1]{0}', space=sflag, size = 0x4, scoped, tag = 'scoped memory for hbnn_forward.3']
    #allocation4 [shape = 's32[1]{0}', space=sflag, size = 0x4, scoped, tag = 'scoped memory for hbnn_forward.3']
    #allocation5 [shape = 'u8[512]{0}', space=smem, size = 0x200, scoped, tag = 'output window, operand 1, single buffered']
    %27 = vsyncpa [#allocation4], 0
    %28 = vsyncpa [#allocation3], 0
    // Predicated region
    $region2: #{hbnn_forward.3} parent=1 // pred_check
      _
    $region3: #{hbnn_forward.3} parent=1 // pred_check_branch
      %30 = sbr.rel (0) target = $region5
    $region4: #{hbnn_forward.3} parent=1 // pred_region
      %32 = vsyncadd [#allocation4], 0
      %s34 = sshll.u32 %s0, 4
      %s35 = int_to_ptr.vmem [resolvable:$true] %s34
      %37 = dma.vmem_to_smem %s35, 16, [#allocation2], [#allocation4]
    $region5: #{hbnn_forward.3} parent=1 // pred_fallthru
      _
    // Predicated region
    $region6: #{hbnn_forward.3} parent=1 // pred_check
      _
    $region7: #{hbnn_forward.3} parent=1 // pred_check_branch
      %39 = sbr.rel (0) target = $region9
    $region8: #{hbnn_forward.3} parent=1 // pred_region
      _
    $region9: #{hbnn_forward.3} parent=1 // pred_fallthru
      _
    // Predicated region
    $region10: #{hbnn_forward.3} parent=1 // pred_check
      _
    $region11: #{hbnn_forward.3} parent=1 // pred_check_branch
      %41 = sbr.rel (0) target = $region13
    $region12: #{hbnn_forward.3} parent=1 // pred_region
      _
    $region13: #{hbnn_forward.3} parent=1 // pred_fallthru
      _
    // Predicated region
    $region14: #{hbnn_forward.3} parent=1 // pred_check
      _
    $region15: #{hbnn_forward.3} parent=1 // pred_check_branch
      %43 = sbr.rel (0) target = $region17
    $region16: #{hbnn_forward.3} parent=1 // pred_region
      _
    $region17: #{hbnn_forward.3} parent=1 // pred_fallthru
      _
    // Predicated region
    $region18: #{hbnn_forward.3} parent=1 // pred_check
      _
    $region19: #{hbnn_forward.3} parent=1 // pred_check_branch
      %45 = sbr.rel (0) target = $region21
    $region20: #{hbnn_forward.3} parent=1 // pred_region
      _
    $region21: #{hbnn_forward.3} parent=1 // pred_fallthru
      _
    // Predicated region
    $region22: #{hbnn_forward.3} parent=1 // pred_check
      _
    $region23: #{hbnn_forward.3} parent=1 // pred_check_branch
      %47 = sbr.rel (0) target = $region25
    $region24: #{hbnn_forward.3} parent=1 // pred_region
      _
    $region25: #{hbnn_forward.3} parent=1 // pred_fallthru
      _
    // Predicated region
    $region26: #{hbnn_forward.3} parent=1 // pred_check
      _
    $region27: #{hbnn_forward.3} parent=1 // pred_check_branch
      %49 = sbr.rel (0) target = $region29
    $region28: #{hbnn_forward.3} parent=1 // pred_region
      _
    $region29: #{hbnn_forward.3} parent=1 // pred_fallthru
      _
    // Predicated region
    $region30: #{hbnn_forward.3} parent=1 // pred_check
      _
    $region31: #{hbnn_forward.3} parent=1 // pred_check_branch
      %51 = sbr.rel (0) target = $region33
    $region32: #{hbnn_forward.3} parent=1 // pred_region
      _
    $region33: #{hbnn_forward.3} parent=1 // pred_fallthru
      _
    // Predicated region
    $region34: #{hbnn_forward.3} parent=1 // pred_check
      _
    $region35: #{hbnn_forward.3} parent=1 // pred_check_branch
      %53 = sbr.rel (0) target = $region37
    $region36: #{hbnn_forward.3} parent=1 // pred_region
      _
    $region37: #{hbnn_forward.3} parent=1 // pred_fallthru
      _
    // Predicated region
    $region38: #{hbnn_forward.3} parent=1 // pred_check
      _
    $region39: #{hbnn_forward.3} parent=1 // pred_check_branch
      %55 = sbr.rel (0) target = $region41
    $region40: #{hbnn_forward.3} parent=1 // pred_region
      _
    $region41: #{hbnn_forward.3} parent=1 // pred_fallthru
      _
    // Predicated region
    $region42: #{hbnn_forward.3} parent=1 // pred_check
      _
    $region43: #{hbnn_forward.3} parent=1 // pred_check_branch
      %57 = sbr.rel (0) target = $region45
    $region44: #{hbnn_forward.3} parent=1 // pred_region
      _
    $region45: #{hbnn_forward.3} parent=1 // pred_fallthru
      _
    // Predicated region
    $region46: #{hbnn_forward.3} parent=1 // pred_check
      _
    $region47: #{hbnn_forward.3} parent=1 // pred_check_branch
      %59 = sbr.rel (0) target = $region49
    $region48: #{hbnn_forward.3} parent=1 // pred_region
      _
    $region49: #{hbnn_forward.3} parent=1 // pred_fallthru
      _
    // Predicated region
    $region50: #{hbnn_forward.3} parent=1 // pred_check
      _
    $region51: #{hbnn_forward.3} parent=1 // pred_check_branch
      %61 = sbr.rel (0) target = $region53
    $region52: #{hbnn_forward.3} parent=1 // pred_region
      _
    $region53: #{hbnn_forward.3} parent=1 // pred_fallthru
      _
    // Predicated region
    $region54: #{hbnn_forward.3} parent=1 // pred_check
      _
    $region55: #{hbnn_forward.3} parent=1 // pred_check_branch
      %63 = sbr.rel (0) target = $region57
    $region56: #{hbnn_forward.3} parent=1 // pred_region
      _
    $region57: #{hbnn_forward.3} parent=1 // pred_fallthru
      _
    // Predicated region
    $region58: #{hbnn_forward.3} parent=1 // pred_check
      _
    $region59: #{hbnn_forward.3} parent=1 // pred_check_branch
      %65 = sbr.rel (0) target = $region61
    $region60: #{hbnn_forward.3} parent=1 // pred_region
      _
    $region61: #{hbnn_forward.3} parent=1 // pred_fallthru
      _
    // Predicated region
    $region62: #{hbnn_forward.3} parent=1 // pred_check
      _
    $region63: #{hbnn_forward.3} parent=1 // pred_check_branch
      %67 = sbr.rel (0) target = $region65
    $region64: #{hbnn_forward.3} parent=1 // pred_region
      _
    $region65: #{hbnn_forward.3} parent=1 // pred_fallthru
      _
    // Predicated region
    $region66: #{hbnn_forward.3} parent=1 // pred_check
      _
    $region67: #{hbnn_forward.3} parent=1 // pred_check_branch
      %69 = sbr.rel (0) target = $region69
    $region68: #{hbnn_forward.3} parent=1 // pred_region
      _
    $region69: #{hbnn_forward.3} parent=1 // pred_fallthru
      _
    // Predicated region
    $region70: #{hbnn_forward.3} parent=1 // pred_check
      _
    $region71: #{hbnn_forward.3} parent=1 // pred_check_branch
      %71 = sbr.rel (0) target = $region73
    $region72: #{hbnn_forward.3} parent=1 // pred_region
      _
    $region73: #{hbnn_forward.3} parent=1 // pred_fallthru
      _
    // Predicated region
    $region74: #{hbnn_forward.3} parent=1 // pred_check
      _
    $region75: #{hbnn_forward.3} parent=1 // pred_check_branch
      %73 = sbr.rel (0) target = $region77
    $region76: #{hbnn_forward.3} parent=1 // pred_region
      _
    $region77: #{hbnn_forward.3} parent=1 // pred_fallthru
      _
    // Predicated region
    $region78: #{hbnn_forward.3} parent=1 // pred_check
      _
    $region79: #{hbnn_forward.3} parent=1 // pred_check_branch
      %75 = sbr.rel (0) target = $region81
    $region80: #{hbnn_forward.3} parent=1 // pred_region
      _
    $region81: #{hbnn_forward.3} parent=1 // pred_fallthru
      _
    // Predicated region
    $region82: #{hbnn_forward.3} parent=1 // pred_check
      _
    $region83: #{hbnn_forward.3} parent=1 // pred_check_branch
      %77 = sbr.rel (0) target = $region85
    $region84: #{hbnn_forward.3} parent=1 // pred_region
      %79 = dma.done [#allocation4], 16
    $region85: #{hbnn_forward.3} parent=1 // pred_fallthru
      _
    %80 = sfence
    %v81 = vld [vmem:[%s1] sm:$0xff]
    %s82 = sld [smem:[#allocation2]]
    %s83 = sld [smem:[#allocation2 + $0x1]]
    %s84 = ssub.f32 0.0, %s83
    %v85 = vstv %s84
    %v86 = vmul.f32 %v85, 1.442695
    %v87 = vpow.pop %v86
    %s88 = vtos %v87
    %s89 = smul.f32 %s88, 0.5
    %v90 = vld [vmem:[%s2] sm:$0xff]
    %v91 = vld [vmem:[%s2 + $0x8] sm:$0xff]
    %v92 = vld [vmem:[%s3] sm:$0xff]
    %v93 = vld [vmem:[%s3 + $0x8] sm:$0xff]
    %v94 = vmax.f32 %v92, 0.0
    %v95 = vmax.f32 %v93, 0.0
    %v96 = vand.u32 2147483647, %v92
    %v97 = vand.u32 2147483647, %v93
    %v98 = vsub.f32 0.0, %v96
    %v99 = vsub.f32 0.0, %v97
    %v100 = vmul.f32 %v98, 1.442695
    %v101 = vpow.pop %v100
    %v102 = vmul.f32 %v99, 1.442695
    %v103 = vpow.pop %v102
    %v104 = vadd.f32 %v101, 1.0
    %v105 = vlog2.pop %v104
    %v106 = vmul.f32 %v105, 0.6931472
    %v107 = vmul.f32 -0.5, %v101
    %v108 = vadd.f32 %v107, 1.0
    %v109 = vmul.f32 %v108, %v101
    %v110 = vand.u32 2147483647, %v101
    %vm111 = vcmp.lt.f32.partialorder %v110, 0.0004427343
    %v112 = vsel %vm111, %v109, %v106
    %v113 = vadd.f32 %v103, 1.0
    %v114 = vlog2.pop %v113
    %v115 = vmul.f32 %v114, 0.6931472
    %v116 = vmul.f32 -0.5, %v103
    %v117 = vadd.f32 %v116, 1.0
    %v118 = vmul.f32 %v117, %v103
    %v119 = vand.u32 2147483647, %v103
    %vm120 = vcmp.lt.f32.partialorder %v119, 0.0004427343
    %v121 = vsel %vm120, %v118, %v115
    %v122 = vadd.f32 %v94, %v112
    %v123 = vadd.f32 %v95, %v121
    %v124 = vld [vmem:[%s4] sm:$0xff]
    %v125 = vld [vmem:[%s4 + $0x8] sm:$0xff]
    %v126 = vmul.f32 %v122, %v124
    %v127 = vmul.f32 %v123, %v125
    %v128 = vadd.f32 %v90, %v126
    %v129 = vadd.f32 %v91, %v127
    %v130 = vld [vmem:[%s5] sm:$0x1]
    %v131 = vld [vmem:[%s6] sm:$0x1]
    %v132 = vmax.f32 %v131, 0.0
    %v133 = vand.u32 2147483647, %v131
    %v134 = vsub.f32 0.0, %v133
    %v135 = vmul.f32 %v134, 1.442695
    %v136 = vpow.pop %v135
    %v137 = vadd.f32 %v136, 1.0
    %v138 = vlog2.pop %v137
    %v139 = vmul.f32 %v138, 0.6931472
    %v140 = vmul.f32 -0.5, %v136
    %v141 = vadd.f32 %v140, 1.0
    %v142 = vmul.f32 %v141, %v136
    %v143 = vand.u32 2147483647, %v136
    %vm144 = vcmp.lt.f32.partialorder %v143, 0.0004427343
    %v145 = vsel %vm144, %v142, %v139
    %v146 = vadd.f32 %v132, %v145
    %v147 = vld [vmem:[%s7] sm:$0x1]
    %v148 = vmul.f32 %v146, %v147
    %v149 = vadd.f32 %v130, %v148
    %v151 = vperm.slane %v149, 0
    %vm153 = vcmask 130048
    %v155 = vsel %vm153, %v81, 0
    %157 = vmatpush.msra.mxu0 0.0
    %158 = vmatpush.msra.mxu0 0.0
    %159 = vmatpush.msra.mxu0 0.0
    %160 = vmatpush.msra.mxu0 0.0
    %161 = vmatpush.msra.mxu0 0.0
    %162 = vmatpush.msra.mxu0 0.0
    %163 = vmatpush.msra.mxu0 0.0
    %164 = vmatpush.msra.mxu0 0.0
    %165 = vmatpush.msra.mxu0 0.0
    %166 = vmatpush.msra.mxu0 0.0
    %167 = vmatpush.msra.mxu0 0.0
    %168 = vmatpush.msra.mxu0 0.0
    %169 = vmatpush.msra.mxu0 0.0
    %170 = vmatpush.msra.mxu0 0.0
    %171 = vmatpush.msra.mxu0 %v129
    %172 = vmatpush.msra.mxu0 %v128
    %173 = vmatmul.f32.gmra.mxu0 %v155
    %v174 = vpop.f32.mrf.mxu0
    %v175 = vadd.f32 %v151, %v174
    %176 = vdwg.mxu0
    %v177 = vmax.f32 %v175, 0.0
    %s178 = smul.f32 %s83, 0.5
    %v179 = vlog2.pop %v122
    %v180 = vmul.f32 %v179, 0.6931472
    %v181 = vlog2.pop %v123
    %v182 = vmul.f32 %v181, 0.6931472
    %v183 = vstv %s178
    %v184 = vsub.f32 %v183, %v180
    %v185 = vsub.f32 %v183, %v182
    %v186 = vmul.f32 %v122, %v122
    %v187 = vmul.f32 %v123, %v123
    %v188 = vstv %s82
    %v189 = vsub.f32 %v90, %v188
    %v190 = vsub.f32 %v91, %v188
    %v191 = vmul.f32 %v189, %v189
    %v192 = vmul.f32 %v190, %v190
    %v193 = vadd.f32 %v186, %v191
    %v194 = vadd.f32 %v187, %v192
    %v195 = vstv %s89
    %v196 = vmul.f32 %v193, %v195
    %v197 = vmul.f32 %v194, %v195
    %v198 = vadd.f32 %v184, %v196
    %v199 = vadd.f32 %v185, %v197
    %v200 = vsub.f32 %v198, 0.5
    %v201 = vsub.f32 %v199, 0.5
    %vm202 = vcmask 261120
    %v203 = vsel %vm202, %v200, 0.0
    %v204 = vsel %vm202, %v201, 0.0
    %v205 = vadd.f32 %v203, %v204
    %206 = vadd.xlane.f32.xlu0 %v205
    %v207 = vpop.xlane.xlu0 %206
    %v208 = vrot.slane %v207, 4
    %v209 = vadd.f32 %v207, %v208
    %v210 = vrot.slane %v209, 2
    %v211 = vadd.f32 %v209, %v210
    %v212 = vrot.slane %v211, 1
    %v213 = vadd.f32 %v211, %v212
    %s214 = vtos %v213
    %s215 = sadd.f32 %s214, 0.0
    %v216 = vlog2.pop %v146
    %v217 = vmul.f32 %v216, 0.6931472
    %v218 = vsub.f32 %v183, %v217
    %v219 = vmul.f32 %v146, %v146
    %v220 = vsub.f32 %v130, %v188
    %v221 = vmul.f32 %v220, %v220
    %v222 = vadd.f32 %v219, %v221
    %v223 = vmul.f32 %v222, %v195
    %v224 = vadd.f32 %v218, %v223
    %v225 = vsub.f32 %v224, 0.5
    %vm226 = vcmask 253952
    %v227 = vsel %vm226, %v225, 0.0
    %228 = vadd.xlane.f32.xlu0 %v227
    %v229 = vpop.xlane.xlu0 %228
    %v230 = vrot.slane %v229, 4
    %v231 = vadd.f32 %v229, %v230
    %v232 = vrot.slane %v231, 2
    %v233 = vadd.f32 %v231, %v232
    %v234 = vrot.slane %v233, 1
    %v235 = vadd.f32 %v233, %v234
    %s236 = vtos %v235
    %s237 = sadd.f32 %s215, %s236
    %s238 = smul.f32 %s82, 0.5
    %s239 = smul.f32 %s238, %s82
    %s240 = sadd.f32 %s237, %s239
    %s241 = smul.f32 %s178, %s83
    %s242 = sadd.f32 %s240, %s241
    %s243 = sld [smem:[#allocation2 + $0x2]]
    %s244 = sld [smem:[#allocation2 + $0x3]]
    %s245 = ssub.f32 0.0, %s244
    %v246 = vstv %s245
    %v247 = vmul.f32 %v246, 1.442695
    %v248 = vpow.pop %v247
    %s249 = vtos %v248
    %s250 = smul.f32 %s249, 0.5
    %v251 = vld [vmem:[%s8] sm:$0xff]
    %v252 = vld [vmem:[%s8 + $0x8] sm:$0xff]
    %v253 = vld [vmem:[%s8 + $0x10] sm:$0xff]
    %v254 = vld [vmem:[%s8 + $0x18] sm:$0xff]
    %v255 = vld [vmem:[%s9] sm:$0xff]
    %v256 = vld [vmem:[%s9 + $0x8] sm:$0xff]
    %v257 = vld [vmem:[%s9 + $0x10] sm:$0xff]
    %v258 = vld [vmem:[%s9 + $0x18] sm:$0xff]
    %v259 = vmax.f32 %v255, 0.0
    %v260 = vmax.f32 %v256, 0.0
    %v261 = vmax.f32 %v257, 0.0
    %v262 = vmax.f32 %v258, 0.0
    %v263 = vand.u32 2147483647, %v255
    %v264 = vand.u32 2147483647, %v256
    %v265 = vand.u32 2147483647, %v257
    %v266 = vand.u32 2147483647, %v258
    %v267 = vsub.f32 0.0, %v263
    %v268 = vsub.f32 0.0, %v264
    %v269 = vsub.f32 0.0, %v265
    %v270 = vsub.f32 0.0, %v266
    %v271 = vmul.f32 %v267, 1.442695
    %v272 = vpow.pop %v271
    %v273 = vmul.f32 %v268, 1.442695
    %v274 = vpow.pop %v273
    %v275 = vmul.f32 %v269, 1.442695
    %v276 = vpow.pop %v275
    %v277 = vmul.f32 %v270, 1.442695
    %v278 = vpow.pop %v277
    %v279 = vadd.f32 %v272, 1.0
    %v280 = vlog2.pop %v279
    %v281 = vmul.f32 %v280, 0.6931472
    %v282 = vmul.f32 -0.5, %v272
    %v283 = vadd.f32 %v282, 1.0
    %v284 = vmul.f32 %v283, %v272
    %v285 = vand.u32 2147483647, %v272
    %vm286 = vcmp.lt.f32.partialorder %v285, 0.0004427343
    %v287 = vsel %vm286, %v284, %v281
    %v288 = vadd.f32 %v274, 1.0
    %v289 = vlog2.pop %v288
    %v290 = vmul.f32 %v289, 0.6931472
    %v291 = vmul.f32 -0.5, %v274
    %v292 = vadd.f32 %v291, 1.0
    %v293 = vmul.f32 %v292, %v274
    %v294 = vand.u32 2147483647, %v274
    %vm295 = vcmp.lt.f32.partialorder %v294, 0.0004427343
    %v296 = vsel %vm295, %v293, %v290
    %v297 = vadd.f32 %v276, 1.0
    %v298 = vlog2.pop %v297
    %v299 = vmul.f32 %v298, 0.6931472
    %v300 = vmul.f32 -0.5, %v276
    %v301 = vadd.f32 %v300, 1.0
    %v302 = vmul.f32 %v301, %v276
    %v303 = vand.u32 2147483647, %v276
    %vm304 = vcmp.lt.f32.partialorder %v303, 0.0004427343
    %v305 = vsel %vm304, %v302, %v299
    %v306 = vadd.f32 %v278, 1.0
    %v307 = vlog2.pop %v306
    %v308 = vmul.f32 %v307, 0.6931472
    %v309 = vmul.f32 -0.5, %v278
    %v310 = vadd.f32 %v309, 1.0
    %v311 = vmul.f32 %v310, %v278
    %v312 = vand.u32 2147483647, %v278
    %vm313 = vcmp.lt.f32.partialorder %v312, 0.0004427343
    %v314 = vsel %vm313, %v311, %v308
    %v315 = vadd.f32 %v259, %v287
    %v316 = vadd.f32 %v260, %v296
    %v317 = vadd.f32 %v261, %v305
    %v318 = vadd.f32 %v262, %v314
    %v319 = vld [vmem:[%s10] sm:$0xff]
    %v320 = vld [vmem:[%s10 + $0x8] sm:$0xff]
    %v321 = vld [vmem:[%s10 + $0x10] sm:$0xff]
    %v322 = vld [vmem:[%s10 + $0x18] sm:$0xff]
    %v323 = vmul.f32 %v315, %v319
    %v324 = vmul.f32 %v316, %v320
    %v325 = vmul.f32 %v317, %v321
    %v326 = vmul.f32 %v318, %v322
    %v327 = vadd.f32 %v251, %v323
    %v328 = vadd.f32 %v252, %v324
    %v329 = vadd.f32 %v253, %v325
    %v330 = vadd.f32 %v254, %v326
    %v331 = vld [vmem:[%s11] sm:$0x1]
    %v332 = vld [vmem:[%s12] sm:$0x1]
    %v333 = vmax.f32 %v332, 0.0
    %v334 = vand.u32 2147483647, %v332
    %v335 = vsub.f32 0.0, %v334
    %v336 = vmul.f32 %v335, 1.442695
    %v337 = vpow.pop %v336
    %v338 = vadd.f32 %v337, 1.0
    %v339 = vlog2.pop %v338
    %v340 = vmul.f32 %v339, 0.6931472
    %v341 = vmul.f32 -0.5, %v337
    %v342 = vadd.f32 %v341, 1.0
    %v343 = vmul.f32 %v342, %v337
    %v344 = vand.u32 2147483647, %v337
    %vm345 = vcmp.lt.f32.partialorder %v344, 0.0004427343
    %v346 = vsel %vm345, %v343, %v340
    %v347 = vadd.f32 %v333, %v346
    %v348 = vld [vmem:[%s13] sm:$0x1]
    %v349 = vmul.f32 %v347, %v348
    %v350 = vadd.f32 %v331, %v349
    %v352 = vperm.slane %v350, 0
    %v355 = vsel %vm202, %v177, 0
    %357 = vmatpush.msra.mxu0 0.0
    %358 = vmatpush.msra.mxu0 0.0
    %359 = vmatpush.msra.mxu0 0.0
    %360 = vmatpush.msra.mxu0 0.0
    %361 = vmatpush.msra.mxu0 0.0
    %362 = vmatpush.msra.mxu0 0.0
    %363 = vmatpush.msra.mxu0 0.0
    %364 = vmatpush.msra.mxu0 0.0
    %365 = vmatpush.msra.mxu0 0.0
    %366 = vmatpush.msra.mxu0 0.0
    %367 = vmatpush.msra.mxu0 0.0
    %368 = vmatpush.msra.mxu0 0.0
    %369 = vmatpush.msra.mxu0 %v330
    %370 = vmatpush.msra.mxu0 %v329
    %371 = vmatpush.msra.mxu0 %v328
    %372 = vmatpush.msra.mxu0 %v327
    %373 = vmatmul.f32.gmra.mxu0 %v355
    %v374 = vpop.f32.mrf.mxu0
    %v375 = vadd.f32 %v352, %v374
    %376 = vdwg.mxu0
    %v377 = vmax.f32 %v375, 0.0
    %s378 = smul.f32 %s244, 0.5
    %v379 = vlog2.pop %v315
    %v380 = vmul.f32 %v379, 0.6931472
    %v381 = vlog2.pop %v316
    %v382 = vmul.f32 %v381, 0.6931472
    %v383 = vlog2.pop %v317
    %v384 = vmul.f32 %v383, 0.6931472
    %v385 = vlog2.pop %v318
    %v386 = vmul.f32 %v385, 0.6931472
    %v387 = vstv %s378
    %v388 = vsub.f32 %v387, %v380
    %v389 = vsub.f32 %v387, %v382
    %v390 = vsub.f32 %v387, %v384
    %v391 = vsub.f32 %v387, %v386
    %v392 = vmul.f32 %v315, %v315
    %v393 = vmul.f32 %v316, %v316
    %v394 = vmul.f32 %v317, %v317
    %v395 = vmul.f32 %v318, %v318
    %v396 = vstv %s243
    %v397 = vsub.f32 %v251, %v396
    %v398 = vsub.f32 %v252, %v396
    %v399 = vsub.f32 %v253, %v396
    %v400 = vsub.f32 %v254, %v396
    %v401 = vmul.f32 %v397, %v397
    %v402 = vmul.f32 %v398, %v398
    %v403 = vmul.f32 %v399, %v399
    %v404 = vmul.f32 %v400, %v400
    %v405 = vadd.f32 %v392, %v401
    %v406 = vadd.f32 %v393, %v402
    %v407 = vadd.f32 %v394, %v403
    %v408 = vadd.f32 %v395, %v404
    %v409 = vstv %s250
    %v410 = vmul.f32 %v405, %v409
    %v411 = vmul.f32 %v406, %v409
    %v412 = vmul.f32 %v407, %v409
    %v413 = vmul.f32 %v408, %v409
    %v414 = vadd.f32 %v388, %v410
    %v415 = vadd.f32 %v389, %v411
    %v416 = vadd.f32 %v390, %v412
    %v417 = vadd.f32 %v391, %v413
    %v418 = vsub.f32 %v414, 0.5
    %v419 = vsub.f32 %v415, 0.5
    %v420 = vsub.f32 %v416, 0.5
    %v421 = vsub.f32 %v417, 0.5
    %v422 = vsel %vm202, %v418, 0.0
    %v423 = vsel %vm202, %v419, 0.0
    %v424 = vadd.f32 %v422, %v423
    %v425 = vsel %vm202, %v420, 0.0
    %v426 = vadd.f32 %v424, %v425
    %v427 = vsel %vm202, %v421, 0.0
    %v428 = vadd.f32 %v426, %v427
    %429 = vadd.xlane.f32.xlu0 %v428
    %v430 = vpop.xlane.xlu0 %429
    %v431 = vrot.slane %v430, 4
    %v432 = vadd.f32 %v430, %v431
    %v433 = vrot.slane %v432, 2
    %v434 = vadd.f32 %v432, %v433
    %v435 = vrot.slane %v434, 1
    %v436 = vadd.f32 %v434, %v435
    %s437 = vtos %v436
    %s438 = sadd.f32 %s242, %s437
    %v439 = vlog2.pop %v347
    %v440 = vmul.f32 %v439, 0.6931472
    %v441 = vsub.f32 %v387, %v440
    %v442 = vmul.f32 %v347, %v347
    %v443 = vsub.f32 %v331, %v396
    %v444 = vmul.f32 %v443, %v443
    %v445 = vadd.f32 %v442, %v444
    %v446 = vmul.f32 %v445, %v409
    %v447 = vadd.f32 %v441, %v446
    %v448 = vsub.f32 %v447, 0.5
    %v449 = vsel %vm226, %v448, 0.0
    %450 = vadd.xlane.f32.xlu0 %v449
    %v451 = vpop.xlane.xlu0 %450
    %v452 = vrot.slane %v451, 4
    %v453 = vadd.f32 %v451, %v452
    %v454 = vrot.slane %v453, 2
    %v455 = vadd.f32 %v453, %v454
    %v456 = vrot.slane %v455, 1
    %v457 = vadd.f32 %v455, %v456
    %s458 = vtos %v457
    %s459 = sadd.f32 %s438, %s458
    %s460 = smul.f32 %s243, 0.5
    %s461 = smul.f32 %s460, %s243
    %s462 = sadd.f32 %s459, %s461
    %s463 = smul.f32 %s378, %s244
    %s464 = sadd.f32 %s462, %s463
    %s465 = sld [smem:[#allocation2 + $0x4]]
    %s466 = sld [smem:[#allocation2 + $0x5]]
    %s467 = ssub.f32 0.0, %s466
    %v468 = vstv %s467
    %v469 = vmul.f32 %v468, 1.442695
    %v470 = vpow.pop %v469
    %s471 = vtos %v470
    %s472 = smul.f32 %s471, 0.5
    %v473 = vld [vmem:[%s14] sm:$0xff]
    %v474 = vld [vmem:[%s14 + $0x8] sm:$0xff]
    %v475 = vld [vmem:[%s14 + $0x10] sm:$0xff]
    %v476 = vld [vmem:[%s14 + $0x18] sm:$0xff]
    %v477 = vld [vmem:[%s15] sm:$0xff]
    %v478 = vld [vmem:[%s15 + $0x8] sm:$0xff]
    %v479 = vld [vmem:[%s15 + $0x10] sm:$0xff]
    %v480 = vld [vmem:[%s15 + $0x18] sm:$0xff]
    %v481 = vmax.f32 %v477, 0.0
    %v482 = vmax.f32 %v478, 0.0
    %v483 = vmax.f32 %v479, 0.0
    %v484 = vmax.f32 %v480, 0.0
    %v485 = vand.u32 2147483647, %v477
    %v486 = vand.u32 2147483647, %v478
    %v487 = vand.u32 2147483647, %v479
    %v488 = vand.u32 2147483647, %v480
    %v489 = vsub.f32 0.0, %v485
    %v490 = vsub.f32 0.0, %v486
    %v491 = vsub.f32 0.0, %v487
    %v492 = vsub.f32 0.0, %v488
    %v493 = vmul.f32 %v489, 1.442695
    %v494 = vpow.pop %v493
    %v495 = vmul.f32 %v490, 1.442695
    %v496 = vpow.pop %v495
    %v497 = vmul.f32 %v491, 1.442695
    %v498 = vpow.pop %v497
    %v499 = vmul.f32 %v492, 1.442695
    %v500 = vpow.pop %v499
    %v501 = vadd.f32 %v494, 1.0
    %v502 = vlog2.pop %v501
    %v503 = vmul.f32 %v502, 0.6931472
    %v504 = vmul.f32 -0.5, %v494
    %v505 = vadd.f32 %v504, 1.0
    %v506 = vmul.f32 %v505, %v494
    %v507 = vand.u32 2147483647, %v494
    %vm508 = vcmp.lt.f32.partialorder %v507, 0.0004427343
    %v509 = vsel %vm508, %v506, %v503
    %v510 = vadd.f32 %v496, 1.0
    %v511 = vlog2.pop %v510
    %v512 = vmul.f32 %v511, 0.6931472
    %v513 = vmul.f32 -0.5, %v496
    %v514 = vadd.f32 %v513, 1.0
    %v515 = vmul.f32 %v514, %v496
    %v516 = vand.u32 2147483647, %v496
    %vm517 = vcmp.lt.f32.partialorder %v516, 0.0004427343
    %v518 = vsel %vm517, %v515, %v512
    %v519 = vadd.f32 %v498, 1.0
    %v520 = vlog2.pop %v519
    %v521 = vmul.f32 %v520, 0.6931472
    %v522 = vmul.f32 -0.5, %v498
    %v523 = vadd.f32 %v522, 1.0
    %v524 = vmul.f32 %v523, %v498
    %v525 = vand.u32 2147483647, %v498
    %vm526 = vcmp.lt.f32.partialorder %v525, 0.0004427343
    %v527 = vsel %vm526, %v524, %v521
    %v528 = vadd.f32 %v500, 1.0
    %v529 = vlog2.pop %v528
    %v530 = vmul.f32 %v529, 0.6931472
    %v531 = vmul.f32 -0.5, %v500
    %v532 = vadd.f32 %v531, 1.0
    %v533 = vmul.f32 %v532, %v500
    %v534 = vand.u32 2147483647, %v500
    %vm535 = vcmp.lt.f32.partialorder %v534, 0.0004427343
    %v536 = vsel %vm535, %v533, %v530
    %v537 = vadd.f32 %v481, %v509
    %v538 = vadd.f32 %v482, %v518
    %v539 = vadd.f32 %v483, %v527
    %v540 = vadd.f32 %v484, %v536
    %v541 = vld [vmem:[%s16] sm:$0xff]
    %v542 = vld [vmem:[%s16 + $0x8] sm:$0xff]
    %v543 = vld [vmem:[%s16 + $0x10] sm:$0xff]
    %v544 = vld [vmem:[%s16 + $0x18] sm:$0xff]
    %v545 = vmul.f32 %v537, %v541
    %v546 = vmul.f32 %v538, %v542
    %v547 = vmul.f32 %v539, %v543
    %v548 = vmul.f32 %v540, %v544
    %v549 = vadd.f32 %v473, %v545
    %v550 = vadd.f32 %v474, %v546
    %v551 = vadd.f32 %v475, %v547
    %v552 = vadd.f32 %v476, %v548
    %v553 = vld [vmem:[%s17] sm:$0x1]
    %v554 = vld [vmem:[%s18] sm:$0x1]
    %v555 = vmax.f32 %v554, 0.0
    %v556 = vand.u32 2147483647, %v554
    %v557 = vsub.f32 0.0, %v556
    %v558 = vmul.f32 %v557, 1.442695
    %v559 = vpow.pop %v558
    %v560 = vadd.f32 %v559, 1.0
    %v561 = vlog2.pop %v560
    %v562 = vmul.f32 %v561, 0.6931472
    %v563 = vmul.f32 -0.5, %v559
    %v564 = vadd.f32 %v563, 1.0
    %v565 = vmul.f32 %v564, %v559
    %v566 = vand.u32 2147483647, %v559
    %vm567 = vcmp.lt.f32.partialorder %v566, 0.0004427343
    %v568 = vsel %vm567, %v565, %v562
    %v569 = vadd.f32 %v555, %v568
    %v570 = vld [vmem:[%s19] sm:$0x1]
    %v571 = vmul.f32 %v569, %v570
    %v572 = vadd.f32 %v553, %v571
    %v574 = vperm.slane %v572, 0
    %v577 = vsel %vm202, %v377, 0
    %579 = vmatpush.msra.mxu0 0.0
    %580 = vmatpush.msra.mxu0 0.0
    %581 = vmatpush.msra.mxu0 0.0
    %582 = vmatpush.msra.mxu0 0.0
    %583 = vmatpush.msra.mxu0 0.0
    %584 = vmatpush.msra.mxu0 0.0
    %585 = vmatpush.msra.mxu0 0.0
    %586 = vmatpush.msra.mxu0 0.0
    %587 = vmatpush.msra.mxu0 0.0
    %588 = vmatpush.msra.mxu0 0.0
    %589 = vmatpush.msra.mxu0 0.0
    %590 = vmatpush.msra.mxu0 0.0
    %591 = vmatpush.msra.mxu0 %v552
    %592 = vmatpush.msra.mxu0 %v551
    %593 = vmatpush.msra.mxu0 %v550
    %594 = vmatpush.msra.mxu0 %v549
    %595 = vmatmul.f32.gmra.mxu0 %v577
    %v596 = vpop.f32.mrf.mxu0
    %v597 = vadd.f32 %v574, %v596
    %598 = vdwg.mxu0
    %s599 = smul.f32 %s466, 0.5
    %v600 = vlog2.pop %v537
    %v601 = vmul.f32 %v600, 0.6931472
    %v602 = vlog2.pop %v538
    %v603 = vmul.f32 %v602, 0.6931472
    %v604 = vlog2.pop %v539
    %v605 = vmul.f32 %v604, 0.6931472
    %v606 = vlog2.pop %v540
    %v607 = vmul.f32 %v606, 0.6931472
    %v608 = vstv %s599
    %v609 = vsub.f32 %v608, %v601
    %v610 = vsub.f32 %v608, %v603
    %v611 = vsub.f32 %v608, %v605
    %v612 = vsub.f32 %v608, %v607
    %v613 = vmul.f32 %v537, %v537
    %v614 = vmul.f32 %v538, %v538
    %v615 = vmul.f32 %v539, %v539
    %v616 = vmul.f32 %v540, %v540
    %v617 = vstv %s465
    %v618 = vsub.f32 %v473, %v617
    %v619 = vsub.f32 %v474, %v617
    %v620 = vsub.f32 %v475, %v617
    %v621 = vsub.f32 %v476, %v617
    %v622 = vmul.f32 %v618, %v618
    %v623 = vmul.f32 %v619, %v619
    %v624 = vmul.f32 %v620, %v620
    %v625 = vmul.f32 %v621, %v621
    %v626 = vadd.f32 %v613, %v622
    %v627 = vadd.f32 %v614, %v623
    %v628 = vadd.f32 %v615, %v624
    %v629 = vadd.f32 %v616, %v625
    %v630 = vstv %s472
    %v631 = vmul.f32 %v626, %v630
    %v632 = vmul.f32 %v627, %v630
    %v633 = vmul.f32 %v628, %v630
    %v634 = vmul.f32 %v629, %v630
    %v635 = vadd.f32 %v609, %v631
    %v636 = vadd.f32 %v610, %v632
    %v637 = vadd.f32 %v611, %v633
    %v638 = vadd.f32 %v612, %v634
    %v639 = vsub.f32 %v635, 0.5
    %v640 = vsub.f32 %v636, 0.5
    %v641 = vsub.f32 %v637, 0.5
    %v642 = vsub.f32 %v638, 0.5
    %vm643 = vcmask 64512
    %v644 = vsel %vm643, %v639, 0.0
    %v645 = vsel %vm643, %v640, 0.0
    %v646 = vadd.f32 %v644, %v645
    %v647 = vsel %vm643, %v641, 0.0
    %v648 = vadd.f32 %v646, %v647
    %v649 = vsel %vm643, %v642, 0.0
    %v650 = vadd.f32 %v648, %v649
    %651 = vadd.xlane.f32.xlu0 %v650
    %v652 = vpop.xlane.xlu0 %651
    %v653 = vrot.slane %v652, 4
    %v654 = vadd.f32 %v652, %v653
    %v655 = vrot.slane %v654, 2
    %v656 = vadd.f32 %v654, %v655
    %v657 = vrot.slane %v656, 1
    %v658 = vadd.f32 %v656, %v657
    %s659 = vtos %v658
    %s660 = sadd.f32 %s464, %s659
    %v661 = vlog2.pop %v569
    %v662 = vmul.f32 %v661, 0.6931472
    %v663 = vsub.f32 %v608, %v662
    %v664 = vmul.f32 %v569, %v569
    %v665 = vsub.f32 %v553, %v617
    %v666 = vmul.f32 %v665, %v665
    %v667 = vadd.f32 %v664, %v666
    %v668 = vmul.f32 %v667, %v630
    %v669 = vadd.f32 %v663, %v668
    %v670 = vsub.f32 %v669, 0.5
    %vm671 = vcmask 57344
    %v672 = vsel %vm671, %v670, 0.0
    %673 = vadd.xlane.f32.xlu0 %v672
    %v674 = vpop.xlane.xlu0 %673
    %v675 = vrot.slane %v674, 4
    %v676 = vadd.f32 %v674, %v675
    %v677 = vrot.slane %v676, 2
    %v678 = vadd.f32 %v676, %v677
    %v679 = vrot.slane %v678, 1
    %v680 = vadd.f32 %v678, %v679
    %s681 = vtos %v680
    %s682 = sadd.f32 %s660, %s681
    %s683 = smul.f32 %s465, 0.5
    %s684 = smul.f32 %s683, %s465
    %s685 = sadd.f32 %s682, %s684
    %s686 = smul.f32 %s599, %s466
    %s687 = sadd.f32 %s685, %s686
    %688 = vst.msk [vmem:[%s20] sm:$0xff] %vm643, %v597
    %s689 = scalar_lea.smem [#allocation5], 0
    %690 = sst [smem:[%s689]] %s687
    // Predicated region
    $region86: #{hbnn_forward.3} parent=1 // pred_check
      _
    $region87: #{hbnn_forward.3} parent=1 // pred_check_branch
      %692 = sbr.rel (0) target = $region89
    $region88: #{hbnn_forward.3} parent=1 // pred_region
      _
    $region89: #{hbnn_forward.3} parent=1 // pred_fallthru
      _
    // Predicated region
    $region90: #{hbnn_forward.3} parent=1 // pred_check
      _
    $region91: #{hbnn_forward.3} parent=1 // pred_check_branch
      %694 = sbr.rel (0) target = $region93
    $region92: #{hbnn_forward.3} parent=1 // pred_region
      %696 = vsyncadd [#allocation3], 0
      %s698 = sshll.u32 %s21, 4
      %s699 = int_to_ptr.hbm [resolvable:$true] %s698
      %701 = dma.smem_to_hbm [#allocation5], 16, %s699, [#allocation3]
    $region93: #{hbnn_forward.3} parent=1 // pred_fallthru
      _
    // Predicated region
    $region94: #{hbnn_forward.3} parent=1 // pred_check
      _
    $region95: #{hbnn_forward.3} parent=1 // pred_check_branch
      %703 = sbr.rel (0) target = $region97
    $region96: #{hbnn_forward.3} parent=1 // pred_region
      _
    $region97: #{hbnn_forward.3} parent=1 // pred_fallthru
      _
    // Predicated region
    $region98: #{hbnn_forward.3} parent=1 // pred_check
      _
    $region99: #{hbnn_forward.3} parent=1 // pred_check_branch
      %705 = sbr.rel (0) target = $region101
    $region100: #{hbnn_forward.3} parent=1 // pred_region
      %707 = dma.done [#allocation3], 16
    $region101: #{hbnn_forward.3} parent=1 // pred_fallthru
      _
    %708 = sfence
    %709 = vsyncpa [#allocation3], 1
    %710 = vsyncpa [#allocation4], 1

</llo_original>
